<compile_context>
chip_gen: v5e
topology: v5e:2x2
jax: 0.10.0
libtpu: 0.0.40
codegen_flags: <defaults>
</compile_context>

<pallas_src>
import functools

import jax
import jax.numpy as jnp
import numpy as np
from jax import lax
from jax.experimental import pallas as pl
from jax.experimental.pallas import tpu as pltpu


# ---------------------------------------------------------------------------
# Phase 1: GroupNorm statistics -> per-channel (scale, shift)
# ---------------------------------------------------------------------------
def _stats_kernel(f_ref, gmap_ref, gmap_t_ref, gamma_ref, beta_ref, ss_ref,
                  sum_ref, sq_ref, *, eps, inv_count):
    t = pl.program_id(1)

    @pl.when(t == 0)
    def _init():
        sum_ref[...] = jnp.zeros_like(sum_ref)
        sq_ref[...] = jnp.zeros_like(sq_ref)

    # Spatial reduction on the MXU (ones-row matmul) instead of a sublane
    # reduce: keeps the VPU/XLU free so phase 1 stays DMA-bound.
    x = f_ref[...].astype(jnp.float32)                       # (T, Cf)
    ones = jnp.ones((1, x.shape[0]), dtype=jnp.float32)      # (1, T)
    sum_ref[...] += jnp.dot(ones, x, preferred_element_type=jnp.float32)
    sq_ref[...] += jnp.dot(ones, x * x, preferred_element_type=jnp.float32)

    @pl.when(t == pl.num_programs(1) - 1)
    def _finalize():
        gmap = gmap_ref[...]                                  # (Cf, G) one-hot
        gmap_t = gmap_t_ref[...]                              # (G, Cf)
        gsum = jnp.dot(sum_ref[...], gmap, preferred_element_type=jnp.float32)
        gsq = jnp.dot(sq_ref[...], gmap, preferred_element_type=jnp.float32)
        mean_g = gsum * inv_count                             # (1, G)
        # One-pass E[x^2]-mean^2 can go slightly negative from f32
        # cancellation; clamp before adding eps to avoid NaN from rsqrt.
        var_g = jnp.maximum(gsq * inv_count - mean_g * mean_g, 0.0)
        rstd_g = lax.rsqrt(var_g + eps)
        mean_c = jnp.dot(mean_g, gmap_t, preferred_element_type=jnp.float32)
        rstd_c = jnp.dot(rstd_g, gmap_t, preferred_element_type=jnp.float32)
        gamma = gamma_ref[...]                                # (1, Cf) f32
        beta = beta_ref[...]                                  # (1, Cf) f32
        scale = gamma * rstd_c
        shift = beta - mean_c * scale
        ss_ref[0:1, :] = scale
        ss_ref[1:2, :] = shift


# ---------------------------------------------------------------------------
# Phase 2: (optional in-kernel NN upsample) + 1x1 convs + normalize/modulate
# ---------------------------------------------------------------------------
def _apply_kernel_rep(ss_ref, f_ref, zq_ref, rep_ref, wy_ref, wb_ref,
                      bias_ref, o_ref):
    scale = ss_ref[0:1, :]                                    # (1, Cf) f32
    shift = ss_ref[1:2, :]                                    # (1, Cf) f32
    wy = wy_ref[...]
    wb = wb_ref[...]
    # Nearest-neighbour upsample of the low-res zq tile with a static one-hot
    # replication matrix on the MXU (full-res zq never touches HBM).
    zq_up = jnp.dot(rep_ref[...], zq_ref[...],
                    preferred_element_type=jnp.float32).astype(wy.dtype)
    y = jnp.dot(zq_up, wy, preferred_element_type=jnp.float32) + bias_ref[0:1, :]
    b = jnp.dot(zq_up, wb, preferred_element_type=jnp.float32) + bias_ref[1:2, :]
    fn = f_ref[...].astype(jnp.float32) * scale + shift       # GroupNorm apply
    o_ref[...] = (fn * y + b).astype(o_ref.dtype)


def _apply_kernel_direct(ss_ref, f_ref, zq_ref, wy_ref, wb_ref, bias_ref,
                         o_ref):
    scale = ss_ref[0:1, :]
    shift = ss_ref[1:2, :]
    zq = zq_ref[...]
    y = jnp.dot(zq, wy_ref[...], preferred_element_type=jnp.float32) + bias_ref[0:1, :]
    b = jnp.dot(zq, wb_ref[...], preferred_element_type=jnp.float32) + bias_ref[1:2, :]
    fn = f_ref[...].astype(jnp.float32) * scale + shift
    o_ref[...] = (fn * y + b).astype(o_ref.dtype)


# ---------------------------------------------------------------------------
# Tiling helpers (explicit VMEM byte budget; v7x has only 64 MiB per core)
# ---------------------------------------------------------------------------
def _vmem_capacity_bytes():
    try:
        return int(pltpu.get_tpu_info().vmem_capacity_bytes)
    except Exception:
        return 64 * 1024 * 1024   # conservative default (v7x per-core VMEM)


def _pick_rows_full(H, W, Wz, s_h, est_fn, budget, pos_target):
    """Full-res rows per tile: multiple of s_h, divides H, (8,*)-aligned."""
    HW = H * W
    L_full = (H // s_h) * Wz
    valid, fitting = [], []
    for rows in range(s_h, H + 1, s_h):
        if H % rows:
            continue
        T = rows * W
        L = (rows // s_h) * Wz
        if (T % 8 != 0 and T != HW) or (L % 8 != 0 and L != L_full):
            continue
        valid.append(rows)
        if est_fn(T, L) <= budget:
            fitting.append(rows)
    if fitting:
        small = [r for r in fitting if r * W <= pos_target]
        return max(small) if small else min(fitting)
    if valid:
        return min(valid)   # may exceed budget on exotic shapes
    return H                # whole image as one tile (block == full dims)


def _pick_hw_tile(HW, est_fn, budget, pos_target):
    """Largest divisor of HW that is a multiple of 8, <= pos_target, in budget."""
    for cand in range(min(pos_target, HW), 7, -1):
        if HW % cand == 0 and cand % 8 == 0 and est_fn(cand) <= budget:
            return cand
    return HW


# ---------------------------------------------------------------------------
# Public entry points
# ---------------------------------------------------------------------------
def spatial_norm_nhwc(f, zq, params, *, num_groups, eps=1e-6,
                      matmul_dtype=None, pos_target=2048):
    """Channels-last SpatialNorm.  f: (N,H,W,Cf), zq: (N,Hz,Wz,Czq).

    matmul_dtype: optional (e.g. jnp.bfloat16) dtype for the MXU operands
    (zq, replication matrix, conv weights); accumulation stays f32.  bf16 is
    recommended on v5e; default keeps the input dtype for exact numerics.
    """
    N, H, W, Cf = f.shape
    Nz, Hz, Wz, Czq = zq.shape
    assert N == Nz, "batch mismatch between f and zq"
    assert Cf % num_groups == 0, "f_channels must be divisible by num_groups"
    G = num_groups
    cg = Cf // G
    HW = H * W

    mm_dtype = jnp.dtype(matmul_dtype) if matmul_dtype is not None else jnp.dtype(zq.dtype)
    f_b = jnp.dtype(f.dtype).itemsize
    mm_b = mm_dtype.itemsize

    cap = _vmem_capacity_bytes()
    budget = cap // 2                 # working-set budget for tile selection
    vmem_limit = int(cap * 0.75)      # raise scoped VMEM limit accordingly

    # GroupNorm constants.
    gidx = np.arange(Cf) // cg
    gmap_np = np.zeros((Cf, G), np.float32)
    gmap_np[np.arange(Cf), gidx] = 1.0
    gmap = jnp.asarray(gmap_np)                               # (Cf, G)
    gmap_t = jnp.asarray(np.ascontiguousarray(gmap_np.T))     # (G, Cf)
    gamma = jnp.asarray(params["gamma"], jnp.float32).reshape(1, Cf)
    beta = jnp.asarray(params["beta"], jnp.float32).reshape(1, Cf)

    # 1x1 conv weights/biases (two separate dots -> no unaligned lane slices).
    wy = jnp.asarray(params["wy"]).astype(mm_dtype).reshape(Czq, Cf)
    wb = jnp.asarray(params["wb"]).astype(mm_dtype).reshape(Czq, Cf)
    bias = jnp.stack(
        [jnp.asarray(params["by"], jnp.float32).reshape(Cf),
         jnp.asarray(params["bb"], jnp.float32).reshape(Cf)], axis=0)  # (2, Cf)

    f_l = f.reshape(N, HW, Cf)        # free reshape (channels-last contiguous)

    integer_scale = (H % Hz == 0) and (W % Wz == 0)
    s_h = H // Hz if integer_scale else 0
    s_w = W // Wz if integer_scale else 0
    use_rep = integer_scale and (s_h * s_w > 1)

    if use_rep:
        # In-kernel nearest-neighbour upsample via one-hot replication matmul.
        def est(T, L):
            return (4 * T * Cf * f_b            # f in + out, double-buffered
                    + 2 * L * Czq * mm_b        # low-res zq in, double-buffered
                    + T * L * mm_b              # replication matrix (resident)
                    + 2 * Czq * Cf * mm_b       # conv weights (resident)
                    + T * Czq * (4 + mm_b)      # upsampled zq (f32 + cast)
                    + 3 * T * Cf * 4)           # y, b, fn f32 temporaries

        rows = _pick_rows_full(H, W, Wz, s_h, est, budget, pos_target)
        T = rows * W
        L = (rows // s_h) * Wz
        n_tiles = H // rows

        p = np.arange(T)
        low = ((p // W) // s_h) * Wz + (p % W) // s_w
        rep_np = np.zeros((T, L), np.float32)
        rep_np[p, low] = 1.0
        rep = jnp.asarray(rep_np).astype(mm_dtype)            # (T, L) one-hot

        zq_l = zq.reshape(N, Hz * Wz, Czq)                    # free reshape
        if zq_l.dtype != mm_dtype:
            zq_l = zq_l.astype(mm_dtype)
    else:
        # Fallback: same resolution (free reshape) or non-integer nearest
        # neighbour (pre-gathered at full resolution in HBM).
        if H == Hz and W == Wz:
            zq_full = zq
        else:
            hi = jnp.asarray(np.arange(H) * Hz // H, jnp.int32)
            wi = jnp.asarray(np.arange(W) * Wz // W, jnp.int32)
            zq_full = zq[:, hi][:, :, wi]                     # (N, H, W, Czq)
        zq_l = zq_full.reshape(N, HW, Czq)
        if zq_l.dtype != mm_dtype:
            zq_l = zq_l.astype(mm_dtype)

        def est(T):
            return (4 * T * Cf * f_b + 2 * T * Czq * mm_b
                    + 2 * Czq * Cf * mm_b + 3 * T * Cf * 4 + T * Czq * mm_b)

        T = _pick_hw_tile(HW, est, budget, pos_target)
        n_tiles = HW // T
        rep = None
        L = None

    stats_tile = T
    n_stats = HW // stats_tile
    inv_count = 1.0 / float(HW * cg)

    # -------- Phase 1: statistics (hw axis is a reduction -> "arbitrary") ---
    stats = pl.pallas_call(
        functools.partial(_stats_kernel, eps=eps, inv_count=inv_count),
        out_shape=jax.ShapeDtypeStruct((N, 2, Cf), jnp.float32),
        grid_spec=pltpu.PrefetchScalarGridSpec(
            num_scalar_prefetch=0,
            grid=(N, n_stats),
            in_specs=[
                pl.BlockSpec((pl.Squeezed(), stats_tile, Cf), lambda b, t: (b, t, 0)),
                pl.BlockSpec((Cf, G), lambda b, t: (0, 0)),
                pl.BlockSpec((G, Cf), lambda b, t: (0, 0)),
                pl.BlockSpec((1, Cf), lambda b, t: (0, 0)),
                pl.BlockSpec((1, Cf), lambda b, t: (0, 0)),
            ],
            out_specs=pl.BlockSpec((pl.Squeezed(), 2, Cf), lambda b, t: (b, 0, 0)),
            scratch_shapes=[pltpu.VMEM((1, Cf), jnp.float32),
                            pltpu.VMEM((1, Cf), jnp.float32)],
        ),
        compiler_params=pltpu.CompilerParams(
            dimension_semantics=("parallel", "arbitrary"),
            vmem_limit_bytes=vmem_limit),
    )(f_l, gmap, gmap_t, gamma, beta)

    # -------- Phase 2: apply (fully parallel over batch and spatial tiles) --
    if use_rep:
        out = pl.pallas_call(
            _apply_kernel_rep,
            out_shape=jax.ShapeDtypeStruct((N, HW, Cf), f.dtype),
            grid_spec=pltpu.PrefetchScalarGridSpec(
                num_scalar_prefetch=0,
                grid=(N, n_tiles),
                in_specs=[
                    pl.BlockSpec((pl.Squeezed(), 2, Cf), lambda b, t: (b, 0, 0)),
                    pl.BlockSpec((pl.Squeezed(), T, Cf), lambda b, t: (b, t, 0)),
                    pl.BlockSpec((pl.Squeezed(), L, Czq), lambda b, t: (b, t, 0)),
                    pl.BlockSpec((T, L), lambda b, t: (0, 0)),
                    pl.BlockSpec((Czq, Cf), lambda b, t: (0, 0)),
                    pl.BlockSpec((Czq, Cf), lambda b, t: (0, 0)),
                    pl.BlockSpec((2, Cf), lambda b, t: (0, 0)),
                ],
                out_specs=pl.BlockSpec((pl.Squeezed(), T, Cf),
                                       lambda b, t: (b, t, 0)),
            ),
            compiler_params=pltpu.CompilerParams(
                dimension_semantics=("parallel", "parallel"),
                vmem_limit_bytes=vmem_limit),
        )(stats, f_l, zq_l, rep, wy, wb, bias)
    else:
        out = pl.pallas_call(
            _apply_kernel_direct,
            out_shape=jax.ShapeDtypeStruct((N, HW, Cf), f.dtype),
            grid_spec=pltpu.PrefetchScalarGridSpec(
                num_scalar_prefetch=0,
                grid=(N, n_tiles),
                in_specs=[
                    pl.BlockSpec((pl.Squeezed(), 2, Cf), lambda b, t: (b, 0, 0)),
                    pl.BlockSpec((pl.Squeezed(), T, Cf), lambda b, t: (b, t, 0)),
                    pl.BlockSpec((pl.Squeezed(), T, Czq), lambda b, t: (b, t, 0)),
                    pl.BlockSpec((Czq, Cf), lambda b, t: (0, 0)),
                    pl.BlockSpec((Czq, Cf), lambda b, t: (0, 0)),
                    pl.BlockSpec((2, Cf), lambda b, t: (0, 0)),
                ],
                out_specs=pl.BlockSpec((pl.Squeezed(), T, Cf),
                                       lambda b, t: (b, t, 0)),
            ),
            compiler_params=pltpu.CompilerParams(
                dimension_semantics=("parallel", "parallel"),
                vmem_limit_bytes=vmem_limit),
        )(stats, f_l, zq_l, wy, wb, bias)

    return out.reshape(N, H, W, Cf)


def spatial_norm(f, zq, params, *, num_groups, eps=1e-6, matmul_dtype=None):
    """PyTorch-parity entry: f (N,Cf,H,W), zq (N,Czq,Hz,Wz), both NCHW.

    NOTE: the NCHW<->NHWC transposes here are boundary glue (extra full
    read+write passes done by XLA outside the kernels).  JAX callers that can
    keep activations channels-last should use `spatial_norm_nhwc` directly.
    """
    f_nhwc = jnp.transpose(f, (0, 2, 3, 1))
    zq_nhwc = jnp.transpose(zq, (0, 2, 3, 1))
    out = spatial_norm_nhwc(f_nhwc, zq_nhwc, params, num_groups=num_groups,
                            eps=eps, matmul_dtype=matmul_dtype)
    return jnp.transpose(out, (0, 3, 1, 2))


# ---------------------------------------------------------------------------
# Pure numpy (float64) reference, NCHW, mirrors the PyTorch module.
# ---------------------------------------------------------------------------
def _reference_nchw(f, zq, params, *, num_groups, eps=1e-6):
    f = np.asarray(f, np.float64)
    zq = np.asarray(zq, np.float64)
    N, Cf, H, W = f.shape
    _, Czq, Hz, Wz = zq.shape
    hi = np.arange(H) * Hz // H
    wi = np.arange(W) * Wz // W
    zq_up = zq[:, :, hi, :][:, :, :, wi]

    g = num_groups
    fg = f.reshape(N, g, Cf // g, H, W)
    m = fg.mean(axis=(2, 3, 4), keepdims=True)
    v = fg.var(axis=(2, 3, 4), keepdims=True)
    nf = ((fg - m) / np.sqrt(v + eps)).reshape(N, Cf, H, W)
    gamma = np.asarray(params["gamma"], np.float64)
    beta = np.asarray(params["beta"], np.float64)
    nf = nf * gamma[None, :, None, None] + beta[None, :, None, None]

    wy = np.asarray(params["wy"], np.float64)
    by = np.asarray(params["by"], np.float64)
    wb = np.asarray(params["wb"], np.float64)
    bb = np.asarray(params["bb"], np.float64)
    y = np.einsum("nchw,cd->ndhw", zq_up, wy) + by[None, :, None, None]
    b = np.einsum("nchw,cd->ndhw", zq_up, wb) + bb[None, :, None, None]
    return nf * y + b


if __name__ == "__main__":
    # Small shapes: f_channels=8, zq_channels=4, f spatial 16x16.
    N, Cf, Czq = 2, 8, 4
    H = W = 16
    num_groups = 2
    eps = 1e-6

    key = jax.random.PRNGKey(0)
    kf, kz1, kz2, kg, kb, kwy, kby, kwb, kbb = jax.random.split(key, 9)

    f = jax.random.normal(kf, (N, Cf, H, W), dtype=jnp.float32)
    params = {
        # GroupNorm affine params (num_channels = Cf)
        "gamma": jax.random.normal(kg, (Cf,), dtype=jnp.float32) * 0.1 + 1.0,
        "beta": jax.random.normal(kb, (Cf,), dtype=jnp.float32) * 0.1,
        # conv_y / conv_b: 1x1 Conv2d(zq_channels -> f_channels) as (Czq, Cf)
        "wy": jax.random.normal(kwy, (Czq, Cf), dtype=jnp.float32) * 0.2,
        "by": jax.random.normal(kby, (Cf,), dtype=jnp.float32) * 0.1,
        "wb": jax.random.normal(kwb, (Czq, Cf), dtype=jnp.float32) * 0.2,
        "bb": jax.random.normal(kbb, (Cf,), dtype=jnp.float32) * 0.1,
    }

    # Tolerances leave headroom for MXU f32-emulation precision on TPU.
    tol = dict(rtol=2e-3, atol=2e-3)

    # Case 1: integer 2x nearest upsample -> in-kernel replication-matmul path.
    zq_a = jax.random.normal(kz1, (N, Czq, 8, 8), dtype=jnp.float32)
    out_a = jax.block_until_ready(
        spatial_norm(f, zq_a, params, num_groups=num_groups, eps=eps))
    ref_a = _reference_nchw(f, zq_a, params, num_groups=num_groups, eps=eps)
    np.testing.assert_allclose(np.asarray(out_a), ref_a, **tol)

    # Case 2: non-integer scale (16/6) -> fallback path with pre-gathered zq.
    zq_b = jax.random.normal(kz2, (N, Czq, 6, 6), dtype=jnp.float32)
    out_b = jax.block_until_ready(
        spatial_norm(f, zq_b, params, num_groups=num_groups, eps=eps))
    ref_b = _reference_nchw(f, zq_b, params, num_groups=num_groups, eps=eps)
    np.testing.assert_allclose(np.asarray(out_b), ref_b, **tol)

    print("KERNEL_OK")
</pallas_src>

<mosaic_0001>
module attributes {stable_mosaic.version = 11 : i64} {
  func.func @_stats_kernel(%arg0: i32, %arg1: i32, %arg2: memref<1x256x8xf32, #tpu.memory_space<vmem>>, %arg3: memref<8x2xf32, #tpu.memory_space<vmem>>, %arg4: memref<2x8xf32, #tpu.memory_space<vmem>>, %arg5: memref<1x8xf32, #tpu.memory_space<vmem>>, %arg6: memref<1x8xf32, #tpu.memory_space<vmem>>, %arg7: memref<1x2x8xf32, #tpu.memory_space<vmem>>, %arg8: memref<1x8xf32, #tpu.memory_space<vmem>>, %arg9: memref<1x8xf32, #tpu.memory_space<vmem>>) attributes {dimension_semantics = [#tpu.dimension_semantics<parallel>, #tpu.dimension_semantics<arbitrary>], iteration_bounds = array<i64: 2, 1>, scalar_prefetch = 0 : i64, scratch_operands = 2 : i64, tpu.core_type = #tpu.core_type<tc>, window_params = [{transform_indices = @transform_0, window_bounds = array<i64: 1, 256, 8>}, {pipeline_mode = #tpu.pipeline_mode<synchronous>, transform_indices = @transform_1, window_bounds = array<i64: 8, 2>}, {pipeline_mode = #tpu.pipeline_mode<synchronous>, transform_indices = @transform_2, window_bounds = array<i64: 2, 8>}, {pipeline_mode = #tpu.pipeline_mode<synchronous>, transform_indices = @transform_3, window_bounds = array<i64: 1, 8>}, {pipeline_mode = #tpu.pipeline_mode<synchronous>, transform_indices = @transform_4, window_bounds = array<i64: 1, 8>}, {transform_indices = @transform_5, window_bounds = array<i64: 1, 2, 8>}]} {
    %c0_i32 = arith.constant 0 : i32
    %0 = arith.cmpi eq, %arg1, %c0_i32 : i32
    %1 = arith.extui %0 : i1 to i32
    %c0_i32_0 = arith.constant 0 : i32
    %2 = arith.cmpi ne, %1, %c0_i32_0 : i32
    scf.if %2 {
      %cst_15 = arith.constant 0.000000e+00 : f32
      %18 = vector.broadcast %cst_15 : f32 to vector<1x8xf32>
      %c0_16 = arith.constant 0 : index
      %c0_17 = arith.constant 0 : index
      %19 = vector.load %arg8[%c0_16, %c0_17] : memref<1x8xf32, #tpu.memory_space<vmem>>, vector<1x8xf32>
      tpu.vector_store %arg8[%c0_16, %c0_17], %18 {strides = array<i32>} : memref<1x8xf32, #tpu.memory_space<vmem>>, vector<1x8xf32>,
      %cst_18 = arith.constant 0.000000e+00 : f32
      %20 = vector.broadcast %cst_18 : f32 to vector<1x8xf32>
      %c0_19 = arith.constant 0 : index
      %c0_20 = arith.constant 0 : index
      %21 = vector.load %arg9[%c0_19, %c0_20] : memref<1x8xf32, #tpu.memory_space<vmem>>, vector<1x8xf32>
      tpu.vector_store %arg9[%c0_19, %c0_20], %20 {strides = array<i32>} : memref<1x8xf32, #tpu.memory_space<vmem>>, vector<1x8xf32>,
    } else {
    }
    %c0 = arith.constant 0 : index
    %c0_1 = arith.constant 0 : index
    %c0_2 = arith.constant 0 : index
    %3 = vector.load %arg2[%c0, %c0_1, %c0_2] : memref<1x256x8xf32, #tpu.memory_space<vmem>>, vector<1x256x8xf32>
    %4 = vector.shape_cast %3 : vector<1x256x8xf32> to vector<256x8xf32>
    %cst = arith.constant 1.000000e+00 : f32
    %5 = vector.broadcast %cst : f32 to vector<1x256xf32>
    %c0_3 = arith.constant 0 : index
    %c0_4 = arith.constant 0 : index
    %6 = vector.load %arg8[%c0_3, %c0_4] : memref<1x8xf32, #tpu.memory_space<vmem>>, vector<1x8xf32>
    %cst_5 = arith.constant dense<0.000000e+00> : vector<1x8xf32>
    %7 = tpu.matmul %5, %4, %cst_5 {dimension_numbers = #tpu.dot_dimension_numbers<[1], [0], [0], [1], [0, 0, 1, 1], [], []>} : vector<1x256xf32>, vector<256x8xf32>, vector<1x8xf32> -> vector<1x8xf32>
    %8 = arith.addf %6, %7 : vector<1x8xf32>
    %c0_6 = arith.constant 0 : index
    %c0_7 = arith.constant 0 : index
    %9 = vector.load %arg8[%c0_6, %c0_7] : memref<1x8xf32, #tpu.memory_space<vmem>>, vector<1x8xf32>
    tpu.vector_store %arg8[%c0_6, %c0_7], %8 {strides = array<i32>} : memref<1x8xf32, #tpu.memory_space<vmem>>, vector<1x8xf32>,
    %c0_8 = arith.constant 0 : index
    %c0_9 = arith.constant 0 : index
    %10 = vector.load %arg9[%c0_8, %c0_9] : memref<1x8xf32, #tpu.memory_space<vmem>>, vector<1x8xf32>
    %11 = arith.mulf %4, %4 : vector<256x8xf32>
    %cst_10 = arith.constant dense<0.000000e+00> : vector<1x8xf32>
    %12 = tpu.matmul %5, %11, %cst_10 {dimension_numbers = #tpu.dot_dimension_numbers<[1], [0], [0], [1], [0, 0, 1, 1], [], []>} : vector<1x256xf32>, vector<256x8xf32>, vector<1x8xf32> -> vector<1x8xf32>
    %13 = arith.addf %10, %12 : vector<1x8xf32>
    %c0_11 = arith.constant 0 : index
    %c0_12 = arith.constant 0 : index
    %14 = vector.load %arg9[%c0_11, %c0_12] : memref<1x8xf32, #tpu.memory_space<vmem>>, vector<1x8xf32>
    tpu.vector_store %arg9[%c0_11, %c0_12], %13 {strides = array<i32>} : memref<1x8xf32, #tpu.memory_space<vmem>>, vector<1x8xf32>,
    %c0_i32_13 = arith.constant 0 : i32
    %15 = arith.cmpi eq, %arg1, %c0_i32_13 : i32
    %16 = arith.extui %15 : i1 to i32
    %c0_i32_14 = arith.constant 0 : i32
    %17 = arith.cmpi ne, %16, %c0_i32_14 : i32
    scf.if %17 {
      %c0_15 = arith.constant 0 : index
      %c0_16 = arith.constant 0 : index
      %18 = vector.load %arg3[%c0_15, %c0_16] : memref<8x2xf32, #tpu.memory_space<vmem>>, vector<8x2xf32>
      %c0_17 = arith.constant 0 : index
      %c0_18 = arith.constant 0 : index
      %19 = vector.load %arg4[%c0_17, %c0_18] : memref<2x8xf32, #tpu.memory_space<vmem>>, vector<2x8xf32>
      %c0_19 = arith.constant 0 : index
      %c0_20 = arith.constant 0 : index
      %20 = vector.load %arg8[%c0_19, %c0_20] : memref<1x8xf32, #tpu.memory_space<vmem>>, vector<1x8xf32>
      %cst_21 = arith.constant dense<0.000000e+00> : vector<1x2xf32>
      %21 = tpu.matmul %20, %18, %cst_21 {dimension_numbers = #tpu.dot_dimension_numbers<[1], [0], [0], [1], [0, 0, 1, 1], [], []>} : vector<1x8xf32>, vector<8x2xf32>, vector<1x2xf32> -> vector<1x2xf32>
      %c0_22 = arith.constant 0 : index
      %c0_23 = arith.constant 0 : index
      %22 = vector.load %arg9[%c0_22, %c0_23] : memref<1x8xf32, #tpu.memory_space<vmem>>, vector<1x8xf32>
      %cst_24 = arith.constant dense<0.000000e+00> : vector<1x2xf32>
      %23 = tpu.matmul %22, %18, %cst_24 {dimension_numbers = #tpu.dot_dimension_numbers<[1], [0], [0], [1], [0, 0, 1, 1], [], []>} : vector<1x8xf32>, vector<8x2xf32>, vector<1x2xf32> -> vector<1x2xf32>
      %cst_25 = arith.constant 9.765625E-4 : f32
      %24 = vector.broadcast %cst_25 : f32 to vector<1x2xf32>
      %25 = arith.mulf %21, %24 : vector<1x2xf32>
      %cst_26 = arith.constant 9.765625E-4 : f32
      %26 = vector.broadcast %cst_26 : f32 to vector<1x2xf32>
      %27 = arith.mulf %23, %26 : vector<1x2xf32>
      %28 = arith.mulf %25, %25 : vector<1x2xf32>
      %29 = arith.subf %27, %28 : vector<1x2xf32>
      %cst_27 = arith.constant 0.000000e+00 : f32
      %30 = vector.broadcast %cst_27 : f32 to vector<1x2xf32>
      %31 = arith.maximumf %29, %30 : vector<1x2xf32>
      %cst_28 = arith.constant 9.99999997E-7 : f32
      %32 = vector.broadcast %cst_28 : f32 to vector<1x2xf32>
      %33 = arith.addf %31, %32 : vector<1x2xf32>
      %34 = math.rsqrt %33 : vector<1x2xf32>
      %cst_29 = arith.constant dense<0.000000e+00> : vector<1x8xf32>
      %35 = tpu.matmul %25, %19, %cst_29 {dimension_numbers = #tpu.dot_dimension_numbers<[1], [0], [0], [1], [0, 0, 1, 1], [], []>} : vector<1x2xf32>, vector<2x8xf32>, vector<1x8xf32> -> vector<1x8xf32>
      %cst_30 = arith.constant dense<0.000000e+00> : vector<1x8xf32>
      %36 = tpu.matmul %34, %19, %cst_30 {dimension_numbers = #tpu.dot_dimension_numbers<[1], [0], [0], [1], [0, 0, 1, 1], [], []>} : vector<1x2xf32>, vector<2x8xf32>, vector<1x8xf32> -> vector<1x8xf32>
      %c0_31 = arith.constant 0 : index
      %c0_32 = arith.constant 0 : index
      %37 = vector.load %arg5[%c0_31, %c0_32] : memref<1x8xf32, #tpu.memory_space<vmem>>, vector<1x8xf32>
      %c0_33 = arith.constant 0 : index
      %c0_34 = arith.constant 0 : index
      %38 = vector.load %arg6[%c0_33, %c0_34] : memref<1x8xf32, #tpu.memory_space<vmem>>, vector<1x8xf32>
      %39 = arith.mulf %37, %36 : vector<1x8xf32>
      %40 = arith.mulf %35, %39 : vector<1x8xf32>
      %41 = arith.subf %38, %40 : vector<1x8xf32>
      %c0_35 = arith.constant 0 : index
      %c0_36 = arith.constant 0 : index
      %c0_37 = arith.constant 0 : index
      %42 = vector.load %arg7[%c0_35, %c0_36, %c0_37] : memref<1x2x8xf32, #tpu.memory_space<vmem>>, vector<1x1x8xf32>
      %43 = vector.shape_cast %42 : vector<1x1x8xf32> to vector<1x8xf32>
      %44 = vector.shape_cast %39 : vector<1x8xf32> to vector<1x1x8xf32>
      tpu.vector_store %arg7[%c0_35, %c0_36, %c0_37], %44 {strides = array<i32>} : memref<1x2x8xf32, #tpu.memory_space<vmem>>, vector<1x1x8xf32>,
      %c0_38 = arith.constant 0 : index
      %c1 = arith.constant 1 : index
      %c0_39 = arith.constant 0 : index
      %45 = vector.load %arg7[%c0_38, %c1, %c0_39] : memref<1x2x8xf32, #tpu.memory_space<vmem>>, vector<1x1x8xf32>
      %46 = vector.shape_cast %45 : vector<1x1x8xf32> to vector<1x8xf32>
      %47 = vector.shape_cast %41 : vector<1x8xf32> to vector<1x1x8xf32>
      tpu.vector_store %arg7[%c0_38, %c1, %c0_39], %47 {strides = array<i32>} : memref<1x2x8xf32, #tpu.memory_space<vmem>>, vector<1x1x8xf32>,
    } else {
    }
    return
  }
  func.func @transform_0(%arg0: i32, %arg1: i32) -> (i32, i32, i32) {
    %c0_i32 = arith.constant 0 : i32
    %c0_i32_0 = arith.constant 0 : i32
    return %arg0, %arg1, %c0_i32 : i32, i32, i32
  }
  func.func @transform_1(%arg0: i32, %arg1: i32) -> (i32, i32) {
    %c0_i32 = arith.constant 0 : i32
    %c0_i32_0 = arith.constant 0 : i32
    %c0_i32_1 = arith.constant 0 : i32
    return %c0_i32, %c0_i32_0 : i32, i32
  }
  func.func @transform_2(%arg0: i32, %arg1: i32) -> (i32, i32) {
    %c0_i32 = arith.constant 0 : i32
    %c0_i32_0 = arith.constant 0 : i32
    %c0_i32_1 = arith.constant 0 : i32
    return %c0_i32, %c0_i32_0 : i32, i32
  }
  func.func @transform_3(%arg0: i32, %arg1: i32) -> (i32, i32) {
    %c0_i32 = arith.constant 0 : i32
    %c0_i32_0 = arith.constant 0 : i32
    %c0_i32_1 = arith.constant 0 : i32
    return %c0_i32, %c0_i32_0 : i32, i32
  }
  func.func @transform_4(%arg0: i32, %arg1: i32) -> (i32, i32) {
    %c0_i32 = arith.constant 0 : i32
    %c0_i32_0 = arith.constant 0 : i32
    %c0_i32_1 = arith.constant 0 : i32
    return %c0_i32, %c0_i32_0 : i32, i32
  }
  func.func @transform_5(%arg0: i32, %arg1: i32) -> (i32, i32, i32) {
    %c0_i32 = arith.constant 0 : i32
    %c0_i32_0 = arith.constant 0 : i32
    %c0_i32_1 = arith.constant 0 : i32
    return %arg0, %c0_i32, %c0_i32_0 : i32, i32, i32
  }
}

</mosaic_0001>

<llo_original>
// kernel: tpu_custom_call.1
$region0: #{tpu_custom_call.1}
  #allocation0 [shape = 'u32[]', space=smem, size = 0x4, offset = 0x4, fixed_abs, tag = 'smem constant byte address 0x4 - core index']
  #allocation1 [shape = 'u32[72,128]{1,0:T(1,128)}', space=vmem, size = 0x9000, scoped, tag = 'internal scratch']
  #allocation2 [shape = 'f32[1,8]{1,0:T(1,128)}', space=vmem, size = 0x200, scoped, tag = 'scratch operand']
  #allocation3 [shape = 'f32[1,8]{1,0:T(1,128)}', space=vmem, size = 0x200, scoped, tag = 'scratch operand']
  %s0 = inlined_call_operand.vmem [shape: f32[2,256,8], index: 0, kind: input, shape index: {}]
  %s1 = inlined_call_operand.vmem [shape: f32[8,2], index: 1, kind: input, shape index: {}]
  %s2 = inlined_call_operand.vmem [shape: f32[2,8], index: 2, kind: input, shape index: {}]
  %s3 = inlined_call_operand.vmem [shape: f32[1,8], index: 3, kind: input, shape index: {}]
  %s4 = inlined_call_operand.vmem [shape: f32[1,8], index: 4, kind: input, shape index: {}]
  %s5 = inlined_call_operand.hbm [shape: f32[2,2,8], index: 5, kind: output, shape index: {}]
  %s6 = sld [smem:[#allocation0]]
  $region61: #{tpu_custom_call.1} parent=0
    _
  %s8 = ssub.s32 1, %s6
  %s9 = scalar_select 0, %s8, %s6
  $region1: #{tpu_custom_call.1} parent=0
    #allocation4 [shape = 'u8[2048]{0}', space=vmem, size = 0x800, scoped, tag = 'output window, operand 0']
    #allocation5 [shape = 's32[2]{0}', space=sflag, size = 0x8, scoped, tag = 'scoped memory for tpu_custom_call.1']
    %10 = vsyncpa [#allocation5], 0
    %s11 = scalar_lea.sflag [#allocation5], 1
    %12 = vsyncpa %s11, 0
    loop: start=0, step=1, limit=4
    $region2: #{tpu_custom_call.1} parent=1 // loop_pre_header
      _
    $region3: #{tpu_custom_call.1} parent=1 // loop_header
      %s14 = sphi 0, %s18
      %p15 = scmp.ge.s32.totalorder %s14, 4
      %s21 = sphi 0, %s33
      %s22 = sphi 0, %s29
      %s23 = sphi 0, %s21
      %s24 = sphi 0, %s22
      %s25 = sphi 0, %s23
      %s26 = sphi 0, %s24
      %s38 = sphi 0, %s40
      %s41 = sphi 0, %s38
      %s42 = sphi 0, %s41
      %s58 = sphi 0, %s42
      %s62 = sphi 0, %s62
      %s64 = sphi 0, %s62
      %s65 = sphi 0, %s64
      %s79 = sphi 0, %s65
      %s83 = sphi 0, %s83
      %s85 = sphi 0, %s83
      %s86 = sphi 0, %s85
      %s100 = sphi 0, %s86
      %s104 = sphi 0, %s104
      %s106 = sphi 0, %s104
      %s107 = sphi 0, %s106
      %s121 = sphi 0, %s107
      %s125 = sphi 0, %s125
      %s127 = sphi 0, %s125
      %s128 = sphi 0, %s127
      %s142 = sphi 0, %s128
      %s148 = sphi 0, %s150
      %s151 = sphi 0, %s148
      %s152 = sphi 0, %s151
      %s168 = sphi 0, %s152
    $region4: #{tpu_custom_call.1} parent=1 // loop_header_branch
      %17 = sbr.rel (%p15) target = $region8
    $region5: #{tpu_custom_call.1} parent=1 // loop_body
      %s19 = ssub.s32 %s14, 1
      %s20 = ssub.s32 %s14, 2
      %s27 = sadd.s32 1, %s22
      %p28 = scmp.ge.s32.totalorder %s27, 1
      %s29 = scalar_select %p28, 0, %s27
      %s30 = sadd.s32 1, %s21
      %s31 = scalar_select %p28, %s30, %s21
      %p32 = scmp.ge.s32.totalorder %s31, 2
      %s33 = scalar_select %p32, 0, %s31
      %s34 = ssub.s32 %s21, %s33
      %s35 = ssub.s32 %s22, %s29
      %s36 = sor.u32 %s34, %s35
      %p37 = scmp.eq.s32.totalorder %s36, 0
      %s39 = sadd.s32 %s38, 1
      %s40 = scalar_select %p37, %s38, %s39
      %p43 = pneg %p37
      %p44 = scmp.eq.s32.totalorder %s14, 1
      %p45 = por %p43, %p44
      %p46 = scmp.ne.s32.totalorder %s38, %s41
      %p47 = scmp.eq.s32.totalorder %s14, 0
      %p48 = por %p46, %p47
      %p49 = scmp.ne.s32.totalorder %s38, %s41
      %p50 = scmp.eq.s32.totalorder %s19, 1
      %p51 = por %p49, %p50
      %p52 = scmp.ne.s32.totalorder %s41, %s42
      %p53 = scmp.eq.s32.totalorder %s19, 0
      %p54 = por %p52, %p53
      %p55 = scmp.ne.s32.totalorder %s41, %s42
      %p56 = scmp.eq.s32.totalorder %s20, 1
      %p57 = por %p55, %p56
      %p59 = scmp.ne.s32.totalorder %s42, %s58
      %p60 = scmp.eq.s32.totalorder %s20, 0
      %p61 = por %p59, %p60
      %s63 = sadd.s32 %s62, 1
      %p66 = scmp.eq.s32.totalorder %s14, 1
      %p67 = scmp.ne.s32.totalorder %s62, %s64
      %p68 = scmp.eq.s32.totalorder %s14, 0
      %p69 = por %p67, %p68
      %p70 = scmp.ne.s32.totalorder %s62, %s64
      %p71 = scmp.eq.s32.totalorder %s19, 1
      %p72 = por %p70, %p71
      %p73 = scmp.ne.s32.totalorder %s64, %s65
      %p74 = scmp.eq.s32.totalorder %s19, 0
      %p75 = por %p73, %p74
      %p76 = scmp.ne.s32.totalorder %s64, %s65
      %p77 = scmp.eq.s32.totalorder %s20, 1
      %p78 = por %p76, %p77
      %p80 = scmp.ne.s32.totalorder %s65, %s79
      %p81 = scmp.eq.s32.totalorder %s20, 0
      %p82 = por %p80, %p81
      %s84 = sadd.s32 %s83, 1
      %p87 = scmp.eq.s32.totalorder %s14, 1
      %p88 = scmp.ne.s32.totalorder %s83, %s85
      %p89 = scmp.eq.s32.totalorder %s14, 0
      %p90 = por %p88, %p89
      %p91 = scmp.ne.s32.totalorder %s83, %s85
      %p92 = scmp.eq.s32.totalorder %s19, 1
      %p93 = por %p91, %p92
      %p94 = scmp.ne.s32.totalorder %s85, %s86
      %p95 = scmp.eq.s32.totalorder %s19, 0
      %p96 = por %p94, %p95
      %p97 = scmp.ne.s32.totalorder %s85, %s86
      %p98 = scmp.eq.s32.totalorder %s20, 1
      %p99 = por %p97, %p98
      %p101 = scmp.ne.s32.totalorder %s86, %s100
      %p102 = scmp.eq.s32.totalorder %s20, 0
      %p103 = por %p101, %p102
      %s105 = sadd.s32 %s104, 1
      %p108 = scmp.eq.s32.totalorder %s14, 1
      %p109 = scmp.ne.s32.totalorder %s104, %s106
      %p110 = scmp.eq.s32.totalorder %s14, 0
      %p111 = por %p109, %p110
      %p112 = scmp.ne.s32.totalorder %s104, %s106
      %p113 = scmp.eq.s32.totalorder %s19, 1
      %p114 = por %p112, %p113
      %p115 = scmp.ne.s32.totalorder %s106, %s107
      %p116 = scmp.eq.s32.totalorder %s19, 0
      %p117 = por %p115, %p116
      %p118 = scmp.ne.s32.totalorder %s106, %s107
      %p119 = scmp.eq.s32.totalorder %s20, 1
      %p120 = por %p118, %p119
      %p122 = scmp.ne.s32.totalorder %s107, %s121
      %p123 = scmp.eq.s32.totalorder %s20, 0
      %p124 = por %p122, %p123
      %s126 = sadd.s32 %s125, 1
      %p129 = scmp.eq.s32.totalorder %s14, 1
      %p130 = scmp.ne.s32.totalorder %s125, %s127
      %p131 = scmp.eq.s32.totalorder %s14, 0
      %p132 = por %p130, %p131
      %p133 = scmp.ne.s32.totalorder %s125, %s127
      %p134 = scmp.eq.s32.totalorder %s19, 1
      %p135 = por %p133, %p134
      %p136 = scmp.ne.s32.totalorder %s127, %s128
      %p137 = scmp.eq.s32.totalorder %s19, 0
      %p138 = por %p136, %p137
      %p139 = scmp.ne.s32.totalorder %s127, %s128
      %p140 = scmp.eq.s32.totalorder %s20, 1
      %p141 = por %p139, %p140
      %p143 = scmp.ne.s32.totalorder %s128, %s142
      %p144 = scmp.eq.s32.totalorder %s20, 0
      %p145 = por %p143, %p144
      %s146 = ssub.s32 %s21, %s33
      %p147 = scmp.eq.s32.totalorder %s146, 0
      %s149 = sadd.s32 %s148, 1
      %s150 = scalar_select %p147, %s148, %s149
      %p153 = pneg %p147
      %p154 = scmp.eq.s32.totalorder %s14, 1
      %p155 = por %p153, %p154
      %p156 = scmp.ne.s32.totalorder %s148, %s151
      %p157 = scmp.eq.s32.totalorder %s14, 0
      %p158 = por %p156, %p157
      %p159 = scmp.ne.s32.totalorder %s148, %s151
      %p160 = scmp.eq.s32.totalorder %s19, 1
      %p161 = por %p159, %p160
      %p162 = scmp.ne.s32.totalorder %s151, %s152
      %p163 = scmp.eq.s32.totalorder %s19, 0
      %p164 = por %p162, %p163
      %p165 = scmp.ne.s32.totalorder %s151, %s152
      %p166 = scmp.eq.s32.totalorder %s20, 1
      %p167 = por %p165, %p166
      %p169 = scmp.ne.s32.totalorder %s152, %s168
      %p170 = scmp.eq.s32.totalorder %s20, 0
      %p171 = por %p169, %p170
      %p172 = scmp.le.s32.totalorder 1, %s14
      %p173 = scmp.lt.s32.totalorder %s14, 3
      %p174 = pnand %p172, %p173
      %p175 = pneg %p174
      // Predicated region
      $region9: #{tpu_custom_call.1} parent=5 // pred_check
        _
      $region10: #{tpu_custom_call.1} parent=5 // pred_check_branch
        %177 = sbr.rel (%p174) target = $region12
      $region11: #{tpu_custom_call.1} parent=5 // pred_region
        %s178 = ssub.s32 %s14, 1
        // Predicated region
        $region13: #{tpu_custom_call.1} parent=11 // pred_check
          %p179 = pneg %p75
        $region14: #{tpu_custom_call.1} parent=11 // pred_check_branch
          %181 = sbr.rel (%p179) target = $region16
        $region15: #{tpu_custom_call.1} parent=11 // pred_region
          _
        $region16: #{tpu_custom_call.1} parent=11 // pred_fallthru
          _
        // Predicated region
        $region17: #{tpu_custom_call.1} parent=11 // pred_check
          %p182 = pneg %p96
        $region18: #{tpu_custom_call.1} parent=11 // pred_check_branch
          %184 = sbr.rel (%p182) target = $region20
        $region19: #{tpu_custom_call.1} parent=11 // pred_region
          _
        $region20: #{tpu_custom_call.1} parent=11 // pred_fallthru
          _
        // Predicated region
        $region21: #{tpu_custom_call.1} parent=11 // pred_check
          %p185 = pneg %p117
        $region22: #{tpu_custom_call.1} parent=11 // pred_check_branch
          %187 = sbr.rel (%p185) target = $region24
        $region23: #{tpu_custom_call.1} parent=11 // pred_region
          _
        $region24: #{tpu_custom_call.1} parent=11 // pred_fallthru
          _
        // Predicated region
        $region25: #{tpu_custom_call.1} parent=11 // pred_check
          %p188 = pneg %p138
        $region26: #{tpu_custom_call.1} parent=11 // pred_check_branch
          %190 = sbr.rel (%p188) target = $region28
        $region27: #{tpu_custom_call.1} parent=11 // pred_region
          _
        $region28: #{tpu_custom_call.1} parent=11 // pred_fallthru
          _
      $region12: #{tpu_custom_call.1} parent=5 // pred_fallthru
        _
      %p191 = scmp.lt.s32.totalorder %s14, 2
      // Predicated region
      $region29: #{tpu_custom_call.1} parent=5 // pred_check
        %p192 = pneg %p191
      $region30: #{tpu_custom_call.1} parent=5 // pred_check_branch
        %194 = sbr.rel (%p192) target = $region32
      $region31: #{tpu_custom_call.1} parent=5 // pred_region
        // Predicated region
        $region33: #{tpu_custom_call.1} parent=31 // pred_check
          %p195 = pneg %p48
        $region34: #{tpu_custom_call.1} parent=31 // pred_check_branch
          %197 = sbr.rel (%p195) target = $region36
        $region35: #{tpu_custom_call.1} parent=31 // pred_region
          %s198 = smul.u32 32, %s22
          %p199 = scmp.lt.s32.totalorder %s21, 1
          %s200 = scalar_select %p199, %s21, 1
          %p201 = scmp.lt.s32.totalorder %s198, 31
          %s202 = scalar_select %p201, %s198, 31
          %s203 = smul.addr %s200, 32
          %s204 = sadd.s32 %s202, %s203
          %s205 = smul.addr %s204, 8
          %s206 = scalar_lea.vmem %s0, %s205
          %s207 = smul.u32 32, %s22
        $region36: #{tpu_custom_call.1} parent=31 // pred_fallthru
          _
      $region32: #{tpu_custom_call.1} parent=5 // pred_fallthru
        _
      %p208 = scmp.le.s32.totalorder 1, %s14
      %p209 = scmp.lt.s32.totalorder %s14, 3
      %p210 = pnand %p208, %p209
      %p211 = pneg %p210
      // Predicated region
      $region37: #{tpu_custom_call.1} parent=5 // pred_check
        _
      $region38: #{tpu_custom_call.1} parent=5 // pred_check_branch
        %213 = sbr.rel (%p210) target = $region40
      $region39: #{tpu_custom_call.1} parent=5 // pred_region
        %s214 = ssub.s32 %s14, 1
        %s215 = smul.u32 32, %s24
        %p216 = scmp.lt.s32.totalorder %s23, 1
        %s217 = scalar_select %p216, %s23, 1
        %p218 = scmp.lt.s32.totalorder %s215, 31
        %s219 = scalar_select %p218, %s215, 31
        %s220 = smul.addr %s217, 32
        %s221 = sadd.s32 %s219, %s220
        %s222 = smul.addr %s221, 8
        %s223 = scalar_lea.vmem %s0, %s222
        %p224 = pneg %p54
        %p225 = pneg %p51
        %p226 = pneg %p75
        %p227 = pneg %p72
        %p228 = pneg %p96
        %p229 = pneg %p93
        %p230 = pneg %p117
        %p231 = pneg %p114
        %p232 = pneg %p138
        %p233 = pneg %p135
        %p234 = pneg %p164
        %p235 = pneg %p161
        %s236 = sand.u32 %s151, 1
        %s237 = scalar_lea.sflag [#allocation5], %s236
        %s238 = sand.u32 %s151, 1
        %s239 = smul.addr %s238, 2
        %s240 = scalar_lea.vmem [#allocation4], %s239
        %s241 = smul.u32 32, %s24
        %p242 = scmp.lt.s32.totalorder %s23, 1
        %s243 = scalar_select %p242, %s23, 1
        %p244 = scmp.lt.s32.totalorder %s241, 31
        %s245 = scalar_select %p244, %s241, 31
        %s246 = smul.addr %s243, 32
        %s247 = sadd.s32 %s245, %s246
        %s248 = smul.addr %s247, 8
        %s249 = scalar_lea.vmem %s0, %s248
        %s250 = smul.u32 32, %s24
        %p251 = scmp.eq.s32.totalorder %s24, 0
        // Predicated region
        $region41: #{tpu_custom_call.1} parent=39 // pred_check
          %p252 = pneg %p251
        $region42: #{tpu_custom_call.1} parent=39 // pred_check_branch
          %254 = sbr.rel (%p252) target = $region44
        $region43: #{tpu_custom_call.1} parent=39 // pred_region
          %vm255 = vcmask 57344
          %256 = vst.msk [vmem:[#allocation2] sm:$0x1] %vm255, 0.0
          %257 = vst.msk [vmem:[#allocation3] sm:$0x1] %vm255, 0.0
        $region44: #{tpu_custom_call.1} parent=39 // pred_fallthru
          _
        %v258 = vld [vmem:[%s249] sm:$0xff]
        %v259 = vld [vmem:[%s249 + $0x8] sm:$0xff]
        %v260 = vld [vmem:[%s249 + $0x10] sm:$0xff]
        %v261 = vld [vmem:[%s249 + $0x18] sm:$0xff]
        %v262 = vld [vmem:[%s249 + $0x20] sm:$0xff]
        %v263 = vld [vmem:[%s249 + $0x28] sm:$0xff]
        %v264 = vld [vmem:[%s249 + $0x30] sm:$0xff]
        %v265 = vld [vmem:[%s249 + $0x38] sm:$0xff]
        %v266 = vld [vmem:[%s249 + $0x40] sm:$0xff]
        %v267 = vld [vmem:[%s249 + $0x48] sm:$0xff]
        %v268 = vld [vmem:[%s249 + $0x50] sm:$0xff]
        %v269 = vld [vmem:[%s249 + $0x58] sm:$0xff]
        %v270 = vld [vmem:[%s249 + $0x60] sm:$0xff]
        %v271 = vld [vmem:[%s249 + $0x68] sm:$0xff]
        %v272 = vld [vmem:[%s249 + $0x70] sm:$0xff]
        %v273 = vld [vmem:[%s249 + $0x78] sm:$0xff]
        %v274 = vld [vmem:[%s249 + $0x80] sm:$0xff]
        %v275 = vld [vmem:[%s249 + $0x88] sm:$0xff]
        %v276 = vld [vmem:[%s249 + $0x90] sm:$0xff]
        %v277 = vld [vmem:[%s249 + $0x98] sm:$0xff]
        %v278 = vld [vmem:[%s249 + $0xa0] sm:$0xff]
        %v279 = vld [vmem:[%s249 + $0xa8] sm:$0xff]
        %v280 = vld [vmem:[%s249 + $0xb0] sm:$0xff]
        %v281 = vld [vmem:[%s249 + $0xb8] sm:$0xff]
        %v282 = vld [vmem:[%s249 + $0xc0] sm:$0xff]
        %v283 = vld [vmem:[%s249 + $0xc8] sm:$0xff]
        %v284 = vld [vmem:[%s249 + $0xd0] sm:$0xff]
        %v285 = vld [vmem:[%s249 + $0xd8] sm:$0xff]
        %v286 = vld [vmem:[%s249 + $0xe0] sm:$0xff]
        %v287 = vld [vmem:[%s249 + $0xe8] sm:$0xff]
        %v288 = vld [vmem:[%s249 + $0xf0] sm:$0xff]
        %v289 = vld [vmem:[%s249 + $0xf8] sm:$0xff]
        %v290 = vld [vmem:[#allocation2] sm:$0x1]
        %291 = vmatpush.msra.mxu0 %v273
        %292 = vmatpush.msra.mxu0 %v272
        %293 = vmatpush.msra.mxu0 %v271
        %294 = vmatpush.msra.mxu0 %v270
        %295 = vmatpush.msra.mxu0 %v269
        %296 = vmatpush.msra.mxu0 %v268
        %297 = vmatpush.msra.mxu0 %v267
        %298 = vmatpush.msra.mxu0 %v266
        %299 = vmatpush.msra.mxu0 %v265
        %300 = vmatpush.msra.mxu0 %v264
        %301 = vmatpush.msra.mxu0 %v263
        %302 = vmatpush.msra.mxu0 %v262
        %303 = vmatpush.msra.mxu0 %v261
        %304 = vmatpush.msra.mxu0 %v260
        %305 = vmatpush.msra.mxu0 %v259
        %306 = vmatpush.msra.mxu0 %v258
        %307 = vmatmul.f32.gmra.mxu0 1.0
        %v308 = vpop.f32.mrf.mxu0
        %v309 = vadd.f32 0.0, %v308
        %310 = vdwg.mxu0
        %311 = vmatpush.msra.mxu0 %v289
        %312 = vmatpush.msra.mxu0 %v288
        %313 = vmatpush.msra.mxu0 %v287
        %314 = vmatpush.msra.mxu0 %v286
        %315 = vmatpush.msra.mxu0 %v285
        %316 = vmatpush.msra.mxu0 %v284
        %317 = vmatpush.msra.mxu0 %v283
        %318 = vmatpush.msra.mxu0 %v282
        %319 = vmatpush.msra.mxu0 %v281
        %320 = vmatpush.msra.mxu0 %v280
        %321 = vmatpush.msra.mxu0 %v279
        %322 = vmatpush.msra.mxu0 %v278
        %323 = vmatpush.msra.mxu0 %v277
        %324 = vmatpush.msra.mxu0 %v276
        %325 = vmatpush.msra.mxu0 %v275
        %326 = vmatpush.msra.mxu0 %v274
        %327 = vmatmul.f32.gmra.mxu0 1.0
        %v328 = vpop.f32.mrf.mxu0
        %v329 = vadd.f32 %v309, %v328
        %330 = vdwg.mxu0
        %v331 = vadd.f32 %v290, %v329
        %vm332 = vcmask 57344
        %333 = vst.msk [vmem:[#allocation2] sm:$0x1] %vm332, %v331
        %v334 = vld [vmem:[#allocation3] sm:$0x1]
        %v335 = vmul.f32 %v258, %v258
        %v336 = vmul.f32 %v259, %v259
        %v337 = vmul.f32 %v260, %v260
        %v338 = vmul.f32 %v261, %v261
        %v339 = vmul.f32 %v262, %v262
        %v340 = vmul.f32 %v263, %v263
        %v341 = vmul.f32 %v264, %v264
        %v342 = vmul.f32 %v265, %v265
        %v343 = vmul.f32 %v266, %v266
        %v344 = vmul.f32 %v267, %v267
        %v345 = vmul.f32 %v268, %v268
        %v346 = vmul.f32 %v269, %v269
        %v347 = vmul.f32 %v270, %v270
        %v348 = vmul.f32 %v271, %v271
        %v349 = vmul.f32 %v272, %v272
        %v350 = vmul.f32 %v273, %v273
        %v351 = vmul.f32 %v274, %v274
        %v352 = vmul.f32 %v275, %v275
        %v353 = vmul.f32 %v276, %v276
        %v354 = vmul.f32 %v277, %v277
        %v355 = vmul.f32 %v278, %v278
        %v356 = vmul.f32 %v279, %v279
        %v357 = vmul.f32 %v280, %v280
        %v358 = vmul.f32 %v281, %v281
        %v359 = vmul.f32 %v282, %v282
        %v360 = vmul.f32 %v283, %v283
        %v361 = vmul.f32 %v284, %v284
        %v362 = vmul.f32 %v285, %v285
        %v363 = vmul.f32 %v286, %v286
        %v364 = vmul.f32 %v287, %v287
        %v365 = vmul.f32 %v288, %v288
        %v366 = vmul.f32 %v289, %v289
        %367 = vmatpush.msra.mxu0 %v350
        %368 = vmatpush.msra.mxu0 %v349
        %369 = vmatpush.msra.mxu0 %v348
        %370 = vmatpush.msra.mxu0 %v347
        %371 = vmatpush.msra.mxu0 %v346
        %372 = vmatpush.msra.mxu0 %v345
        %373 = vmatpush.msra.mxu0 %v344
        %374 = vmatpush.msra.mxu0 %v343
        %375 = vmatpush.msra.mxu0 %v342
        %376 = vmatpush.msra.mxu0 %v341
        %377 = vmatpush.msra.mxu0 %v340
        %378 = vmatpush.msra.mxu0 %v339
        %379 = vmatpush.msra.mxu0 %v338
        %380 = vmatpush.msra.mxu0 %v337
        %381 = vmatpush.msra.mxu0 %v336
        %382 = vmatpush.msra.mxu0 %v335
        %383 = vmatmul.f32.gmra.mxu0 1.0
        %v384 = vpop.f32.mrf.mxu0
        %v385 = vadd.f32 0.0, %v384
        %386 = vdwg.mxu0
        %387 = vmatpush.msra.mxu0 %v366
        %388 = vmatpush.msra.mxu0 %v365
        %389 = vmatpush.msra.mxu0 %v364
        %390 = vmatpush.msra.mxu0 %v363
        %391 = vmatpush.msra.mxu0 %v362
        %392 = vmatpush.msra.mxu0 %v361
        %393 = vmatpush.msra.mxu0 %v360
        %394 = vmatpush.msra.mxu0 %v359
        %395 = vmatpush.msra.mxu0 %v358
        %396 = vmatpush.msra.mxu0 %v357
        %397 = vmatpush.msra.mxu0 %v356
        %398 = vmatpush.msra.mxu0 %v355
        %399 = vmatpush.msra.mxu0 %v354
        %400 = vmatpush.msra.mxu0 %v353
        %401 = vmatpush.msra.mxu0 %v352
        %402 = vmatpush.msra.mxu0 %v351
        %403 = vmatmul.f32.gmra.mxu0 1.0
        %v404 = vpop.f32.mrf.mxu0
        %v405 = vadd.f32 %v385, %v404
        %406 = vdwg.mxu0
        %v407 = vadd.f32 %v334, %v405
        %408 = vst.msk [vmem:[#allocation3] sm:$0x1] %vm332, %v407
        // Predicated region
        $region45: #{tpu_custom_call.1} parent=39 // pred_check
          %p409 = pneg %p251
        $region46: #{tpu_custom_call.1} parent=39 // pred_check_branch
          %411 = sbr.rel (%p409) target = $region48
        $region47: #{tpu_custom_call.1} parent=39 // pred_region
          %v412 = vld [vmem:[%s1] sm:$0xff]
          %v413 = vld [vmem:[%s2] sm:$0x3]
          %v414 = vld [vmem:[#allocation2] sm:$0x1]
          %vm415 = vcmask 64512
          %v417 = vsel %vm415, %v414, 0
          %419 = vmatpush.msra.mxu0 0.0
          %420 = vmatpush.msra.mxu0 0.0
          %421 = vmatpush.msra.mxu0 0.0
          %422 = vmatpush.msra.mxu0 0.0
          %423 = vmatpush.msra.mxu0 0.0
          %424 = vmatpush.msra.mxu0 0.0
          %425 = vmatpush.msra.mxu0 0.0
          %426 = vmatpush.msra.mxu0 0.0
          %427 = vmatpush.msra.mxu0 0.0
          %428 = vmatpush.msra.mxu0 0.0
          %429 = vmatpush.msra.mxu0 0.0
          %430 = vmatpush.msra.mxu0 0.0
          %431 = vmatpush.msra.mxu0 0.0
          %432 = vmatpush.msra.mxu0 0.0
          %433 = vmatpush.msra.mxu0 0.0
          %434 = vmatpush.msra.mxu0 %v412
          %435 = vmatmul.f32.gmra.mxu0 %v417
          %v436 = vpop.f32.mrf.mxu0
          %v437 = vadd.f32 0.0, %v436
          %438 = vdwg.mxu0
          %v439 = vld [vmem:[#allocation3] sm:$0x1]
          %v441 = vsel %vm415, %v439, 0
          %443 = vmatpush.msra.mxu0 0.0
          %444 = vmatpush.msra.mxu0 0.0
          %445 = vmatpush.msra.mxu0 0.0
          %446 = vmatpush.msra.mxu0 0.0
          %447 = vmatpush.msra.mxu0 0.0
          %448 = vmatpush.msra.mxu0 0.0
          %449 = vmatpush.msra.mxu0 0.0
          %450 = vmatpush.msra.mxu0 0.0
          %451 = vmatpush.msra.mxu0 0.0
          %452 = vmatpush.msra.mxu0 0.0
          %453 = vmatpush.msra.mxu0 0.0
          %454 = vmatpush.msra.mxu0 0.0
          %455 = vmatpush.msra.mxu0 0.0
          %456 = vmatpush.msra.mxu0 0.0
          %457 = vmatpush.msra.mxu0 0.0
          %458 = vmatpush.msra.mxu0 %v412
          %459 = vmatmul.f32.gmra.mxu0 %v441
          %v460 = vpop.f32.mrf.mxu0
          %v461 = vadd.f32 0.0, %v460
          %462 = vdwg.mxu0
          %v463 = vmul.f32 %v437, 0.0009765625
          %v464 = vmul.f32 %v461, 0.0009765625
          %v465 = vmul.f32 %v463, %v463
          %v466 = vsub.f32 %v464, %v465
          %v467 = vmax.f32 %v466, 0.0
          %v468 = vadd.f32 %v467, 1e-06
          %v469 = vrsqrt.pop %v468
          %v470 = vmul.f32 %v469, %v468
          %v471 = vmul.f32 %v470, %v469
          %v472 = vmul.f32 0.5, %v471
          %v473 = vsub.f32 1.5, %v472
          %v474 = vmul.f32 %v469, %v473
          %vm475 = vweird.f32 %v468
          %vm476 = vweird.f32 %v469
          %vm477 = vmor %vm475, %vm476
          %v478 = vsel %vm477, %v469, %v474
          %vm479 = vcmask 15360
          %v481 = vsel %vm479, %v463, 0
          %vm483 = vcmask 1041408
          %v485 = vsel %vm483, %v413, 0
          %487 = vmatpush.msra.mxu0 0.0
          %488 = vmatpush.msra.mxu0 0.0
          %489 = vmatpush.msra.mxu0 0.0
          %490 = vmatpush.msra.mxu0 0.0
          %491 = vmatpush.msra.mxu0 0.0
          %492 = vmatpush.msra.mxu0 0.0
          %493 = vmatpush.msra.mxu0 0.0
          %494 = vmatpush.msra.mxu0 0.0
          %495 = vmatpush.msra.mxu0 0.0
          %496 = vmatpush.msra.mxu0 0.0
          %497 = vmatpush.msra.mxu0 0.0
          %498 = vmatpush.msra.mxu0 0.0
          %499 = vmatpush.msra.mxu0 0.0
          %500 = vmatpush.msra.mxu0 0.0
          %501 = vmatpush.msra.mxu0 0.0
          %502 = vmatpush.msra.mxu0 %v485
          %503 = vmatmul.f32.gmra.mxu0 %v481
          %v504 = vpop.f32.mrf.mxu0
          %v505 = vadd.f32 0.0, %v504
          %506 = vdwg.mxu0
          %v508 = vsel %vm479, %v478, 0
          %510 = vmatpush.msra.mxu0 0.0
          %511 = vmatpush.msra.mxu0 0.0
          %512 = vmatpush.msra.mxu0 0.0
          %513 = vmatpush.msra.mxu0 0.0
          %514 = vmatpush.msra.mxu0 0.0
          %515 = vmatpush.msra.mxu0 0.0
          %516 = vmatpush.msra.mxu0 0.0
          %517 = vmatpush.msra.mxu0 0.0
          %518 = vmatpush.msra.mxu0 0.0
          %519 = vmatpush.msra.mxu0 0.0
          %520 = vmatpush.msra.mxu0 0.0
          %521 = vmatpush.msra.mxu0 0.0
          %522 = vmatpush.msra.mxu0 0.0
          %523 = vmatpush.msra.mxu0 0.0
          %524 = vmatpush.msra.mxu0 0.0
          %525 = vmatpush.msra.mxu0 %v485
          %526 = vmatmul.f32.gmra.mxu0 %v508
          %v527 = vpop.f32.mrf.mxu0
          %v528 = vadd.f32 0.0, %v527
          %529 = vdwg.mxu0
          %v530 = vld [vmem:[%s3] sm:$0x1]
          %v531 = vld [vmem:[%s4] sm:$0x1]
          %v532 = vmul.f32 %v530, %v528
          %v533 = vmul.f32 %v505, %v532
          %v534 = vsub.f32 %v531, %v533
          %535 = vst.msk [vmem:[%s240] sm:$0x1] %vm332, %v532
          %536 = vst.msk [vmem:[%s240 + $0x1] sm:$0x1] %vm332, %v534
        $region48: #{tpu_custom_call.1} parent=39 // pred_fallthru
          _
        %s537 = sand.u32 %s151, 1
        %s538 = scalar_lea.sflag [#allocation5], %s537
        %s539 = sand.u32 %s151, 1
        %s540 = smul.addr %s539, 2
        %s541 = scalar_lea.vmem [#allocation4], %s540
        // Predicated region
        $region49: #{tpu_custom_call.1} parent=39 // pred_check
          %p542 = pneg %p161
        $region50: #{tpu_custom_call.1} parent=39 // pred_check_branch
          %544 = sbr.rel (%p542) target = $region52
        $region51: #{tpu_custom_call.1} parent=39 // pred_region
          %546 = vsyncadd %s538, 0
          %s547 = smul.addr %s23, 2
          %s548 = scalar_lea.hbm %s5, %s547
          %s550 = sshll.u32 %s541, 4
          %s551 = int_to_ptr.vmem [resolvable:$true] %s550
          %s552 = sshll.u32 %s548, 4
          %s553 = int_to_ptr.hbm [resolvable:$true] %s552
          %555 = dma.vmem_to_hbm [thread:$0]  %s551, 32, %s553, %s538
        $region52: #{tpu_custom_call.1} parent=39 // pred_fallthru
          _
      $region40: #{tpu_custom_call.1} parent=5 // pred_fallthru
        _
      %p556 = scmp.le.s32.totalorder 2, %s14
      // Predicated region
      $region53: #{tpu_custom_call.1} parent=5 // pred_check
        %p557 = pneg %p556
      $region54: #{tpu_custom_call.1} parent=5 // pred_check_branch
        %559 = sbr.rel (%p557) target = $region56
      $region55: #{tpu_custom_call.1} parent=5 // pred_region
        %s560 = ssub.s32 %s14, 2
        // Predicated region
        $region57: #{tpu_custom_call.1} parent=55 // pred_check
          %p561 = pneg %p167
        $region58: #{tpu_custom_call.1} parent=55 // pred_check_branch
          %563 = sbr.rel (%p561) target = $region60
        $region59: #{tpu_custom_call.1} parent=55 // pred_region
          %s564 = sand.u32 %s152, 1
          %s565 = scalar_lea.sflag [#allocation5], %s564
          %s566 = sand.u32 %s152, 1
          %s567 = smul.addr %s566, 2
          %s568 = scalar_lea.vmem [#allocation4], %s567
          %570 = dma.done %s565, 32
        $region60: #{tpu_custom_call.1} parent=55 // pred_fallthru
          _
      $region56: #{tpu_custom_call.1} parent=5 // pred_fallthru
        _
    $region6: #{tpu_custom_call.1} parent=1 // loop_footer
      %s18 = sadd.s32 1, %s14
    $region7: #{tpu_custom_call.1} parent=1 // loop_footer_branch
      %13 = sbr.rel target = $region3
    $region8: #{tpu_custom_call.1} parent=1 // loop_exit
      _
    %571 = vsyncpa [#allocation5], 1
    %s572 = scalar_lea.sflag [#allocation5], 1
    %573 = vsyncpa %s572, 1

</llo_original>
